<compile_context>
chip_gen: v7x
topology: tpu7x:2x2x1
jax: 0.10.0
libtpu: 0.0.40
codegen_flags: <defaults>
</compile_context>

<pallas_src>
import math

import jax
import jax.numpy as jnp
from jax.experimental import pallas as pl
from jax.experimental.pallas import tpu as pltpu


def ffnn_kernel(x_ref, w1_ref, b1_ref, w2_ref, b2_ref, w3_ref, b3_ref, o_ref):
    # h1 = V1(x)   (no activation between V1 and V2, matching the torch forward)
    x = x_ref[...]
    h1 = jnp.dot(x.astype(jnp.bfloat16), w1_ref[...],
                 preferred_element_type=jnp.float32) + b1_ref[...]
    # h2 = V2(h1)
    h2 = jnp.dot(h1.astype(jnp.bfloat16), w2_ref[...],
                 preferred_element_type=jnp.float32) + b2_ref[...]
    # a = ReLU(h2)   (elementwise kept in f32 — v5e VPU has no bf16)
    a = jnp.maximum(h2, 0.0)
    # out = W(a)
    out = jnp.dot(a.astype(jnp.bfloat16), w3_ref[...],
                  preferred_element_type=jnp.float32) + b3_ref[...]
    o_ref[...] = out.astype(o_ref.dtype)


def _round_up(v, m):
    return ((v + m - 1) // m) * m


def ffnn_forward(x, params, *, block_b=256):
    """x: [B, inp] float32; params: dict of f32 weights [in,out] / biases [1,out]."""
    w1, b1 = params["w1"], params["b1"]
    w2, b2 = params["w2"], params["b2"]
    w3, b3 = params["w3"], params["b3"]

    B, inp = x.shape
    hid1 = w1.shape[1]
    hid2 = w2.shape[1]
    out = w3.shape[1]

    LANE = 128   # lane width: pad all feature dims to a multiple of 128
    SUB = 16     # bf16-friendly sublane multiple for the batch tile

    inp_p = _round_up(inp, LANE)
    hid1_p = _round_up(hid1, LANE)
    hid2_p = _round_up(hid2, LANE)
    out_p = _round_up(out, LANE)

    tb = min(_round_up(B, SUB), block_b)   # batch tile (rows per grid step)
    b_p = _round_up(B, tb)                 # padded batch, multiple of tb

    pad2 = lambda a, r, c: jnp.pad(a, ((0, r - a.shape[0]), (0, c - a.shape[1])))

    # Zero padding is exact: padded input cols hit zero weight rows, padded
    # hidden cols get zero bias, ReLU(0)=0, and padded w3 rows are zero.
    x_p = pad2(x, b_p, inp_p)
    w1_p = pad2(w1, inp_p, hid1_p).astype(jnp.bfloat16)
    w2_p = pad2(w2, hid1_p, hid2_p).astype(jnp.bfloat16)
    w3_p = pad2(w3, hid2_p, out_p).astype(jnp.bfloat16)
    b1_p = pad2(b1, 1, hid1_p)
    b2_p = pad2(b2, 1, hid2_p)
    b3_p = pad2(b3, 1, out_p)

    grid = (b_p // tb,)

    cost = pl.CostEstimate(
        flops=2 * b_p * (inp_p * hid1_p + hid1_p * hid2_p + hid2_p * out_p),
        transcendentals=0,
        bytes_accessed=(x_p.size * 4
                        + (w1_p.size + w2_p.size + w3_p.size) * 2
                        + (b1_p.size + b2_p.size + b3_p.size) * 4
                        + b_p * out_p * 4),
    )

    y_p = pl.pallas_call(
        ffnn_kernel,
        out_shape=jax.ShapeDtypeStruct((b_p, out_p), x.dtype),
        grid_spec=pltpu.PrefetchScalarGridSpec(
            num_scalar_prefetch=0,
            grid=grid,
            in_specs=[
                # activations: one batch tile per grid step
                pl.BlockSpec((tb, inp_p), lambda i: (i, 0)),
                # weights/biases: index_map pinned to (0,0) -> DMA'd once,
                # stay resident in VMEM across batch tiles
                pl.BlockSpec((inp_p, hid1_p), lambda i: (0, 0)),
                pl.BlockSpec((1, hid1_p), lambda i: (0, 0)),
                pl.BlockSpec((hid1_p, hid2_p), lambda i: (0, 0)),
                pl.BlockSpec((1, hid2_p), lambda i: (0, 0)),
                pl.BlockSpec((hid2_p, out_p), lambda i: (0, 0)),
                pl.BlockSpec((1, out_p), lambda i: (0, 0)),
            ],
            out_specs=pl.BlockSpec((tb, out_p), lambda i: (i, 0)),
        ),
        compiler_params=pltpu.CompilerParams(
            dimension_semantics=("parallel",)),
        cost_estimate=cost,
    )(x_p, w1_p, b1_p, w2_p, b2_p, w3_p, b3_p)

    # Slice the real rows/columns back out (layout plumbing, outside kernel).
    return y_p[:B, :out]


def xavier_uniform(key, fan_in, fan_out, dtype=jnp.float32):
    # matches torch.nn.init.xavier_uniform_ (gain=1)
    limit = math.sqrt(6.0 / (fan_in + fan_out))
    # stored as [in, out] (transpose of torch's [out, in])
    return jax.random.uniform(key, (fan_in, fan_out), dtype,
                              minval=-limit, maxval=limit)


def linear_bias(key, fan_in, fan_out, dtype=jnp.float32):
    # matches torch nn.Linear default bias init: U(-1/sqrt(fan_in), 1/sqrt(fan_in))
    bound = 1.0 / math.sqrt(fan_in)
    return jax.random.uniform(key, (1, fan_out), dtype,
                              minval=-bound, maxval=bound)


def init_params(key, inp, hid1, hid2, out):
    k1, k2, k3, k4, k5, k6 = jax.random.split(key, 6)
    return {
        "w1": xavier_uniform(k1, inp, hid1),
        "b1": linear_bias(k2, inp, hid1),
        "w2": xavier_uniform(k3, hid1, hid2),
        "b2": linear_bias(k4, hid1, hid2),
        "w3": xavier_uniform(k5, hid2, out),
        "b3": linear_bias(k6, hid2, out),
    }


def ffnn_reference(x, params):
    h1 = x @ params["w1"] + params["b1"]
    h2 = h1 @ params["w2"] + params["b2"]
    a = jnp.maximum(h2, 0.0)
    return a @ params["w3"] + params["b3"]


if __name__ == "__main__":
    # small shapes consistent with the module: inp=32, hid1=64, hid2=48, out=16
    B, INP, HID1, HID2, OUT = 8, 32, 64, 48, 16

    key = jax.random.PRNGKey(0)
    kx, kp = jax.random.split(key)
    x = jax.random.normal(kx, (B, INP), jnp.float32)
    params = init_params(kp, INP, HID1, HID2, OUT)

    y = ffnn_forward(x, params)
    y = jax.block_until_ready(y)

    y_ref = ffnn_reference(x, params)
    assert y.shape == (B, OUT)
    # bf16 matmul operands with f32 accumulation -> loosened tolerance vs f32 ref
    assert jnp.allclose(y, y_ref, atol=3e-2, rtol=3e-2), "mismatch vs reference"

    print("KERNEL_OK")
</pallas_src>

<mosaic_0001>
module attributes {stable_mosaic.version = 11 : i64} {
  func.func @ffnn_kernel(%arg0: i32, %arg1: memref<16x128xf32, #tpu.memory_space<vmem>>, %arg2: memref<128x128xbf16, #tpu.memory_space<vmem>>, %arg3: memref<1x128xf32, #tpu.memory_space<vmem>>, %arg4: memref<128x128xbf16, #tpu.memory_space<vmem>>, %arg5: memref<1x128xf32, #tpu.memory_space<vmem>>, %arg6: memref<128x128xbf16, #tpu.memory_space<vmem>>, %arg7: memref<1x128xf32, #tpu.memory_space<vmem>>, %arg8: memref<16x128xf32, #tpu.memory_space<vmem>>) attributes {dimension_semantics = [#tpu.dimension_semantics<parallel>], iteration_bounds = array<i64: 1>, scalar_prefetch = 0 : i64, scratch_operands = 0 : i64, tpu.core_type = #tpu.core_type<tc>, window_params = [{transform_indices = @transform_0, window_bounds = array<i64: 16, 128>}, {pipeline_mode = #tpu.pipeline_mode<synchronous>, transform_indices = @transform_1, window_bounds = array<i64: 128, 128>}, {pipeline_mode = #tpu.pipeline_mode<synchronous>, transform_indices = @transform_2, window_bounds = array<i64: 1, 128>}, {pipeline_mode = #tpu.pipeline_mode<synchronous>, transform_indices = @transform_3, window_bounds = array<i64: 128, 128>}, {pipeline_mode = #tpu.pipeline_mode<synchronous>, transform_indices = @transform_4, window_bounds = array<i64: 1, 128>}, {pipeline_mode = #tpu.pipeline_mode<synchronous>, transform_indices = @transform_5, window_bounds = array<i64: 128, 128>}, {pipeline_mode = #tpu.pipeline_mode<synchronous>, transform_indices = @transform_6, window_bounds = array<i64: 1, 128>}, {transform_indices = @transform_7, window_bounds = array<i64: 16, 128>}]} {
    %c0 = arith.constant 0 : index
    %c0_0 = arith.constant 0 : index
    %0 = vector.load %arg1[%c0, %c0_0] : memref<16x128xf32, #tpu.memory_space<vmem>>, vector<16x128xf32>
    %1 = arith.truncf %0 : vector<16x128xf32> to vector<16x128xbf16>
    %c0_1 = arith.constant 0 : index
    %c0_2 = arith.constant 0 : index
    %2 = vector.load %arg2[%c0_1, %c0_2] : memref<128x128xbf16, #tpu.memory_space<vmem>>, vector<128x128xbf16>
    %cst = arith.constant dense<0.000000e+00> : vector<16x128xf32>
    %3 = tpu.matmul %1, %2, %cst {dimension_numbers = #tpu.dot_dimension_numbers<[1], [0], [0], [1], [0, 0, 1, 1], [], []>} : vector<16x128xbf16>, vector<128x128xbf16>, vector<16x128xf32> -> vector<16x128xf32>
    %c0_3 = arith.constant 0 : index
    %c0_4 = arith.constant 0 : index
    %4 = vector.load %arg3[%c0_3, %c0_4] : memref<1x128xf32, #tpu.memory_space<vmem>>, vector<1x128xf32>
    %5 = vector.broadcast %4 : vector<1x128xf32> to vector<16x128xf32>
    %6 = arith.addf %3, %5 : vector<16x128xf32>
    %7 = arith.truncf %6 : vector<16x128xf32> to vector<16x128xbf16>
    %c0_5 = arith.constant 0 : index
    %c0_6 = arith.constant 0 : index
    %8 = vector.load %arg4[%c0_5, %c0_6] : memref<128x128xbf16, #tpu.memory_space<vmem>>, vector<128x128xbf16>
    %cst_7 = arith.constant dense<0.000000e+00> : vector<16x128xf32>
    %9 = tpu.matmul %7, %8, %cst_7 {dimension_numbers = #tpu.dot_dimension_numbers<[1], [0], [0], [1], [0, 0, 1, 1], [], []>} : vector<16x128xbf16>, vector<128x128xbf16>, vector<16x128xf32> -> vector<16x128xf32>
    %c0_8 = arith.constant 0 : index
    %c0_9 = arith.constant 0 : index
    %10 = vector.load %arg5[%c0_8, %c0_9] : memref<1x128xf32, #tpu.memory_space<vmem>>, vector<1x128xf32>
    %11 = vector.broadcast %10 : vector<1x128xf32> to vector<16x128xf32>
    %12 = arith.addf %9, %11 : vector<16x128xf32>
    %cst_10 = arith.constant 0.000000e+00 : f32
    %13 = vector.broadcast %cst_10 : f32 to vector<16x128xf32>
    %14 = arith.maximumf %12, %13 : vector<16x128xf32>
    %15 = arith.truncf %14 : vector<16x128xf32> to vector<16x128xbf16>
    %c0_11 = arith.constant 0 : index
    %c0_12 = arith.constant 0 : index
    %16 = vector.load %arg6[%c0_11, %c0_12] : memref<128x128xbf16, #tpu.memory_space<vmem>>, vector<128x128xbf16>
    %cst_13 = arith.constant dense<0.000000e+00> : vector<16x128xf32>
    %17 = tpu.matmul %15, %16, %cst_13 {dimension_numbers = #tpu.dot_dimension_numbers<[1], [0], [0], [1], [0, 0, 1, 1], [], []>} : vector<16x128xbf16>, vector<128x128xbf16>, vector<16x128xf32> -> vector<16x128xf32>
    %c0_14 = arith.constant 0 : index
    %c0_15 = arith.constant 0 : index
    %18 = vector.load %arg7[%c0_14, %c0_15] : memref<1x128xf32, #tpu.memory_space<vmem>>, vector<1x128xf32>
    %19 = vector.broadcast %18 : vector<1x128xf32> to vector<16x128xf32>
    %20 = arith.addf %17, %19 : vector<16x128xf32>
    %c0_16 = arith.constant 0 : index
    %c0_17 = arith.constant 0 : index
    %21 = vector.load %arg8[%c0_16, %c0_17] : memref<16x128xf32, #tpu.memory_space<vmem>>, vector<16x128xf32>
    tpu.vector_store %arg8[%c0_16, %c0_17], %20 {strides = array<i32>} : memref<16x128xf32, #tpu.memory_space<vmem>>, vector<16x128xf32>,
    return
  }
  func.func @transform_0(%arg0: i32) -> (i32, i32) {
    %c0_i32 = arith.constant 0 : i32
    %c0_i32_0 = arith.constant 0 : i32
    return %arg0, %c0_i32 : i32, i32
  }
  func.func @transform_1(%arg0: i32) -> (i32, i32) {
    %c0_i32 = arith.constant 0 : i32
    %c0_i32_0 = arith.constant 0 : i32
    %c0_i32_1 = arith.constant 0 : i32
    return %c0_i32, %c0_i32_0 : i32, i32
  }
  func.func @transform_2(%arg0: i32) -> (i32, i32) {
    %c0_i32 = arith.constant 0 : i32
    %c0_i32_0 = arith.constant 0 : i32
    %c0_i32_1 = arith.constant 0 : i32
    return %c0_i32, %c0_i32_0 : i32, i32
  }
  func.func @transform_3(%arg0: i32) -> (i32, i32) {
    %c0_i32 = arith.constant 0 : i32
    %c0_i32_0 = arith.constant 0 : i32
    %c0_i32_1 = arith.constant 0 : i32
    return %c0_i32, %c0_i32_0 : i32, i32
  }
  func.func @transform_4(%arg0: i32) -> (i32, i32) {
    %c0_i32 = arith.constant 0 : i32
    %c0_i32_0 = arith.constant 0 : i32
    %c0_i32_1 = arith.constant 0 : i32
    return %c0_i32, %c0_i32_0 : i32, i32
  }
  func.func @transform_5(%arg0: i32) -> (i32, i32) {
    %c0_i32 = arith.constant 0 : i32
    %c0_i32_0 = arith.constant 0 : i32
    %c0_i32_1 = arith.constant 0 : i32
    return %c0_i32, %c0_i32_0 : i32, i32
  }
  func.func @transform_6(%arg0: i32) -> (i32, i32) {
    %c0_i32 = arith.constant 0 : i32
    %c0_i32_0 = arith.constant 0 : i32
    %c0_i32_1 = arith.constant 0 : i32
    return %c0_i32, %c0_i32_0 : i32, i32
  }
  func.func @transform_7(%arg0: i32) -> (i32, i32) {
    %c0_i32 = arith.constant 0 : i32
    %c0_i32_0 = arith.constant 0 : i32
    return %arg0, %c0_i32 : i32, i32
  }
}

</mosaic_0001>

<llo_original>
// kernel: tpu_custom_call.1
$region0: #{tpu_custom_call.1}
  #allocation0 [shape = 'u32[]', space=smem, size = 0x4, offset = 0x4, fixed_abs, tag = 'smem constant byte address 0x4 - core index']
  #allocation1 [shape = 'u32[144,128]{1,0:T(1,128)}', space=vmem, size = 0x12000, scoped, tag = 'internal scratch']
  %s0 = inlined_call_operand.hbm [shape: f32[16,128], index: 0, kind: input, shape index: {}]
  %s1 = inlined_call_operand.hbm [shape: bf16[128,128], index: 1, kind: input, shape index: {}]
  %s2 = inlined_call_operand.vmem [shape: f32[1,128], index: 2, kind: input, shape index: {}]
  %s3 = inlined_call_operand.hbm [shape: bf16[128,128], index: 3, kind: input, shape index: {}]
  %s4 = inlined_call_operand.vmem [shape: f32[1,128], index: 4, kind: input, shape index: {}]
  %s5 = inlined_call_operand.hbm [shape: bf16[128,128], index: 5, kind: input, shape index: {}]
  %s6 = inlined_call_operand.vmem [shape: f32[1,128], index: 6, kind: input, shape index: {}]
  %s7 = inlined_call_operand.hbm [shape: f32[16,128], index: 7, kind: output, shape index: {}]
  %s8 = sld [smem:[#allocation0]]
  $region54: #{tpu_custom_call.1} parent=0
    _
  %s10 = ssub.s32 1, %s8
  %s11 = scalar_select 0, %s10, %s8
  $region1: #{tpu_custom_call.1} parent=0
    #allocation2 [shape = 'u8[8192]{0}', space=vmem, size = 0x2000, scoped, tag = 'input window, operand 0, single buffered']
    #allocation3 [shape = 's32[1]{0}', space=sflag, size = 0x4, scoped, tag = 'scoped memory for tpu_custom_call.1']
    #allocation4 [shape = 's32[1]{0}', space=sflag, size = 0x4, scoped, tag = 'scoped memory for tpu_custom_call.1']
    #allocation5 [shape = 'u8[32768]{0}', space=vmem, size = 0x8000, scoped, tag = 'input window, operand 1, single buffered']
    #allocation6 [shape = 's32[1]{0}', space=sflag, size = 0x4, scoped, tag = 'scoped memory for tpu_custom_call.1']
    #allocation7 [shape = 'u8[32768]{0}', space=vmem, size = 0x8000, scoped, tag = 'input window, operand 3, single buffered']
    #allocation8 [shape = 'u8[32768]{0}', space=vmem, size = 0x8000, scoped, tag = 'input window, operand 5, single buffered']
    #allocation9 [shape = 's32[1]{0}', space=sflag, size = 0x4, scoped, tag = 'scoped memory for tpu_custom_call.1']
    #allocation10 [shape = 'u8[8192]{0}', space=vmem, size = 0x2000, scoped, tag = 'output window, operand 0, single buffered']
    %12 = vsyncpa [#allocation3], 0
    %13 = vsyncpa [#allocation6], 0
    %14 = vsyncpa [#allocation9], 0
    %15 = vsyncpa [#allocation4], 0
    // Predicated region
    $region2: #{tpu_custom_call.1} parent=1 // pred_check
      _
    $region3: #{tpu_custom_call.1} parent=1 // pred_check_branch
      %17 = sbr.rel (0) target = $region5
    $region4: #{tpu_custom_call.1} parent=1 // pred_region
      %s19 = ssub.s32 256, 256
      %20 = vsyncadd [#allocation3], %s19
      %s21 = sshll.u32 [#allocation2], 4
      %s22 = int_to_ptr.vmem [resolvable:$true] %s21
      %27 = dma.hbm_to_vmem [thread:$0]  %s0, 256, %s22, [#allocation3], 128, 128, 8
    $region5: #{tpu_custom_call.1} parent=1 // pred_fallthru
      _
    // Predicated region
    $region6: #{tpu_custom_call.1} parent=1 // pred_check
      _
    $region7: #{tpu_custom_call.1} parent=1 // pred_check_branch
      %29 = sbr.rel (0) target = $region9
    $region8: #{tpu_custom_call.1} parent=1 // pred_region
      %s31 = ssub.s32 1024, 1024
      %32 = vsyncadd [#allocation6], %s31
      %s33 = sshll.u32 [#allocation5], 4
      %s34 = int_to_ptr.vmem [resolvable:$true] %s33
      %39 = dma.hbm_to_vmem [thread:$0]  %s1, 1024, %s34, [#allocation6], 64, 64, 4
    $region9: #{tpu_custom_call.1} parent=1 // pred_fallthru
      _
    // Predicated region
    $region10: #{tpu_custom_call.1} parent=1 // pred_check
      _
    $region11: #{tpu_custom_call.1} parent=1 // pred_check_branch
      %41 = sbr.rel (0) target = $region13
    $region12: #{tpu_custom_call.1} parent=1 // pred_region
      _
    $region13: #{tpu_custom_call.1} parent=1 // pred_fallthru
      _
    // Predicated region
    $region14: #{tpu_custom_call.1} parent=1 // pred_check
      _
    $region15: #{tpu_custom_call.1} parent=1 // pred_check_branch
      %43 = sbr.rel (0) target = $region17
    $region16: #{tpu_custom_call.1} parent=1 // pred_region
      %s45 = ssub.s32 1024, 1024
      %46 = vsyncadd [#allocation6], %s45
      %s47 = sshll.u32 [#allocation7], 4
      %s48 = int_to_ptr.vmem [resolvable:$true] %s47
      %53 = dma.hbm_to_vmem [thread:$0]  %s3, 1024, %s48, [#allocation6], 64, 64, 4
    $region17: #{tpu_custom_call.1} parent=1 // pred_fallthru
      _
    // Predicated region
    $region18: #{tpu_custom_call.1} parent=1 // pred_check
      _
    $region19: #{tpu_custom_call.1} parent=1 // pred_check_branch
      %55 = sbr.rel (0) target = $region21
    $region20: #{tpu_custom_call.1} parent=1 // pred_region
      _
    $region21: #{tpu_custom_call.1} parent=1 // pred_fallthru
      _
    // Predicated region
    $region22: #{tpu_custom_call.1} parent=1 // pred_check
      _
    $region23: #{tpu_custom_call.1} parent=1 // pred_check_branch
      %57 = sbr.rel (0) target = $region25
    $region24: #{tpu_custom_call.1} parent=1 // pred_region
      %s59 = ssub.s32 1024, 1024
      %60 = vsyncadd [#allocation9], %s59
      %s61 = sshll.u32 [#allocation8], 4
      %s62 = int_to_ptr.vmem [resolvable:$true] %s61
      %67 = dma.hbm_to_vmem [thread:$0]  %s5, 1024, %s62, [#allocation9], 64, 64, 4
    $region25: #{tpu_custom_call.1} parent=1 // pred_fallthru
      _
    // Predicated region
    $region26: #{tpu_custom_call.1} parent=1 // pred_check
      _
    $region27: #{tpu_custom_call.1} parent=1 // pred_check_branch
      %69 = sbr.rel (0) target = $region29
    $region28: #{tpu_custom_call.1} parent=1 // pred_region
      _
    $region29: #{tpu_custom_call.1} parent=1 // pred_fallthru
      _
    // Predicated region
    $region30: #{tpu_custom_call.1} parent=1 // pred_check
      _
    $region31: #{tpu_custom_call.1} parent=1 // pred_check_branch
      %71 = sbr.rel (0) target = $region33
    $region32: #{tpu_custom_call.1} parent=1 // pred_region
      %72 = dma.done [#allocation3], 256
    $region33: #{tpu_custom_call.1} parent=1 // pred_fallthru
      _
    // Predicated region
    $region34: #{tpu_custom_call.1} parent=1 // pred_check
      _
    $region35: #{tpu_custom_call.1} parent=1 // pred_check_branch
      %74 = sbr.rel (0) target = $region37
    $region36: #{tpu_custom_call.1} parent=1 // pred_region
      %75 = dma.done [#allocation6], 1024
    $region37: #{tpu_custom_call.1} parent=1 // pred_fallthru
      _
    // Predicated region
    $region38: #{tpu_custom_call.1} parent=1 // pred_check
      _
    $region39: #{tpu_custom_call.1} parent=1 // pred_check_branch
      %77 = sbr.rel (0) target = $region41
    $region40: #{tpu_custom_call.1} parent=1 // pred_region
      %78 = dma.done [#allocation6], 1024
    $region41: #{tpu_custom_call.1} parent=1 // pred_fallthru
      _
    // Predicated region
    $region42: #{tpu_custom_call.1} parent=1 // pred_check
      _
    $region43: #{tpu_custom_call.1} parent=1 // pred_check_branch
      %80 = sbr.rel (0) target = $region45
    $region44: #{tpu_custom_call.1} parent=1 // pred_region
      %81 = dma.done [#allocation9], 1024
    $region45: #{tpu_custom_call.1} parent=1 // pred_fallthru
      _
    %v83 = vld [vmem:[#allocation2] sm:$0xff]
    %v84 = vld [vmem:[#allocation2 + $0x8] sm:$0xff]
    %v85 = vpack.c.bf16 %v84, %v83
    %v86 = vld [vmem:[#allocation5] sm:$0xf]
    %v87 = vld [vmem:[#allocation5 + $0x4] sm:$0xf]
    %v88 = vld [vmem:[#allocation5 + $0x8] sm:$0xf]
    %v89 = vld [vmem:[#allocation5 + $0xc] sm:$0xf]
    %v90 = vld [vmem:[#allocation5 + $0x10] sm:$0xf]
    %v91 = vld [vmem:[#allocation5 + $0x14] sm:$0xf]
    %v92 = vld [vmem:[#allocation5 + $0x18] sm:$0xf]
    %v93 = vld [vmem:[#allocation5 + $0x1c] sm:$0xf]
    %v94 = vld [vmem:[#allocation5 + $0x20] sm:$0xf]
    %v95 = vld [vmem:[#allocation5 + $0x24] sm:$0xf]
    %v96 = vld [vmem:[#allocation5 + $0x28] sm:$0xf]
    %v97 = vld [vmem:[#allocation5 + $0x2c] sm:$0xf]
    %v98 = vld [vmem:[#allocation5 + $0x30] sm:$0xf]
    %v99 = vld [vmem:[#allocation5 + $0x34] sm:$0xf]
    %v100 = vld [vmem:[#allocation5 + $0x38] sm:$0xf]
    %v101 = vld [vmem:[#allocation5 + $0x3c] sm:$0xf]
    %v102 = vld [vmem:[%s2] sm:$0x1]
    %v104 = vlaneseq
    %v105 = vshrl.u32 %v104, 7
    %v106 = vsub.s32 0, %v105
    %v107 = vrot.slane %v102, %v106
    %v125 = vunpack.c.l.b16 %v86
    %v126 = vunpack.c.l.b16 %v87
    %v127 = vunpack.c.l.b16 %v88
    %v128 = vunpack.c.l.b16 %v89
    %v129 = vunpack.c.l.b16 %v90
    %v130 = vunpack.c.l.b16 %v91
    %v131 = vunpack.c.l.b16 %v92
    %v132 = vunpack.c.l.b16 %v93
    %v133 = vunpack.c.l.b16 %v94
    %v134 = vunpack.c.l.b16 %v95
    %v135 = vunpack.c.l.b16 %v96
    %v136 = vunpack.c.l.b16 %v97
    %v137 = vunpack.c.l.b16 %v98
    %v138 = vunpack.c.l.b16 %v99
    %v139 = vunpack.c.l.b16 %v100
    %v140 = vunpack.c.l.b16 %v101
    %v141 = vpack.c.b16 %v126, %v125
    %v142 = vpack.c.b16 %v128, %v127
    %v143 = vpack.c.b16 %v130, %v129
    %v144 = vpack.c.b16 %v132, %v131
    %v145 = vpack.c.b16 %v134, %v133
    %v146 = vpack.c.b16 %v136, %v135
    %v147 = vpack.c.b16 %v138, %v137
    %v148 = vpack.c.b16 %v140, %v139
    %157 = vmatprep.subr.bf16.mxu0 0
    %158 = vmatpush1.bf16.msra.mxu0 %v141
    %159 = vmatprep.subr.bf16.mxu0 0
    %160 = vmatpush1.bf16.msra.mxu0 %v142
    %161 = vmatprep.subr.bf16.mxu0 0
    %162 = vmatpush1.bf16.msra.mxu0 %v143
    %163 = vmatprep.subr.bf16.mxu0 0
    %164 = vmatpush1.bf16.msra.mxu0 %v144
    %165 = vmatprep.subr.bf16.mxu0 0
    %166 = vmatpush1.bf16.msra.mxu0 %v145
    %167 = vmatprep.subr.bf16.mxu0 0
    %168 = vmatpush1.bf16.msra.mxu0 %v146
    %169 = vmatprep.subr.bf16.mxu0 0
    %170 = vmatpush1.bf16.msra.mxu0 %v147
    %171 = vmatprep.subr.bf16.mxu0 0
    %172 = vmatpush1.bf16.msra.mxu0 %v148
    %173 = vmatprep.subr.bf16.mxu0 0
    %174 = vmatpush1.bf16.msra.mxu0 0
    %175 = vmatprep.subr.bf16.mxu0 0
    %176 = vmatpush1.bf16.msra.mxu0 0
    %177 = vmatprep.subr.bf16.mxu0 0
    %178 = vmatpush1.bf16.msra.mxu0 0
    %179 = vmatprep.subr.bf16.mxu0 0
    %180 = vmatpush1.bf16.msra.mxu0 0
    %181 = vmatprep.subr.bf16.mxu0 0
    %182 = vmatpush1.bf16.msra.mxu0 0
    %183 = vmatprep.subr.bf16.mxu0 0
    %184 = vmatpush1.bf16.msra.mxu0 0
    %185 = vmatprep.subr.bf16.mxu0 0
    %186 = vmatpush1.bf16.msra.mxu0 0
    %187 = vmatprep.subr.bf16.mxu0 0
    %188 = vmatpush1.bf16.msra.mxu0 0
    %189 = vmatprep.mubr.bf16.mxu0 0
    %190 = vmatmul.mubr.bf16.gmra.mrb[0].mxu0 %v85
    %v191 = vpop.f32.mrb[0].mxu0
    %v192 = vadd.f32 %v107, %v191
    %v193 = vpop.f32.mrb[0].mxu0
    %v194 = vpop.f32.mrb[0].mxu0
    %v195 = vadd.f32 %v107, %v194
    %v196 = vpop.f32.mrb[0].mxu0
    %197 = vdwg.mxu0
    %v198 = vpack.c.bf16 %v195, %v192
    %v199 = vld [vmem:[#allocation7] sm:$0xf]
    %v200 = vld [vmem:[#allocation7 + $0x4] sm:$0xf]
    %v201 = vld [vmem:[#allocation7 + $0x8] sm:$0xf]
    %v202 = vld [vmem:[#allocation7 + $0xc] sm:$0xf]
    %v203 = vld [vmem:[#allocation7 + $0x10] sm:$0xf]
    %v204 = vld [vmem:[#allocation7 + $0x14] sm:$0xf]
    %v205 = vld [vmem:[#allocation7 + $0x18] sm:$0xf]
    %v206 = vld [vmem:[#allocation7 + $0x1c] sm:$0xf]
    %v207 = vld [vmem:[#allocation7 + $0x20] sm:$0xf]
    %v208 = vld [vmem:[#allocation7 + $0x24] sm:$0xf]
    %v209 = vld [vmem:[#allocation7 + $0x28] sm:$0xf]
    %v210 = vld [vmem:[#allocation7 + $0x2c] sm:$0xf]
    %v211 = vld [vmem:[#allocation7 + $0x30] sm:$0xf]
    %v212 = vld [vmem:[#allocation7 + $0x34] sm:$0xf]
    %v213 = vld [vmem:[#allocation7 + $0x38] sm:$0xf]
    %v214 = vld [vmem:[#allocation7 + $0x3c] sm:$0xf]
    %v215 = vld [vmem:[%s4] sm:$0x1]
    %v217 = vlaneseq
    %v218 = vshrl.u32 %v217, 7
    %v219 = vsub.s32 0, %v218
    %v220 = vrot.slane %v215, %v219
    %v238 = vunpack.c.l.b16 %v199
    %v239 = vunpack.c.l.b16 %v200
    %v240 = vunpack.c.l.b16 %v201
    %v241 = vunpack.c.l.b16 %v202
    %v242 = vunpack.c.l.b16 %v203
    %v243 = vunpack.c.l.b16 %v204
    %v244 = vunpack.c.l.b16 %v205
    %v245 = vunpack.c.l.b16 %v206
    %v246 = vunpack.c.l.b16 %v207
    %v247 = vunpack.c.l.b16 %v208
    %v248 = vunpack.c.l.b16 %v209
    %v249 = vunpack.c.l.b16 %v210
    %v250 = vunpack.c.l.b16 %v211
    %v251 = vunpack.c.l.b16 %v212
    %v252 = vunpack.c.l.b16 %v213
    %v253 = vunpack.c.l.b16 %v214
    %v254 = vpack.c.b16 %v239, %v238
    %v255 = vpack.c.b16 %v241, %v240
    %v256 = vpack.c.b16 %v243, %v242
    %v257 = vpack.c.b16 %v245, %v244
    %v258 = vpack.c.b16 %v247, %v246
    %v259 = vpack.c.b16 %v249, %v248
    %v260 = vpack.c.b16 %v251, %v250
    %v261 = vpack.c.b16 %v253, %v252
    %270 = vmatprep.subr.bf16.mxu0 0
    %271 = vmatpush1.bf16.msra.mxu0 %v254
    %272 = vmatprep.subr.bf16.mxu0 0
    %273 = vmatpush1.bf16.msra.mxu0 %v255
    %274 = vmatprep.subr.bf16.mxu0 0
    %275 = vmatpush1.bf16.msra.mxu0 %v256
    %276 = vmatprep.subr.bf16.mxu0 0
    %277 = vmatpush1.bf16.msra.mxu0 %v257
    %278 = vmatprep.subr.bf16.mxu0 0
    %279 = vmatpush1.bf16.msra.mxu0 %v258
    %280 = vmatprep.subr.bf16.mxu0 0
    %281 = vmatpush1.bf16.msra.mxu0 %v259
    %282 = vmatprep.subr.bf16.mxu0 0
    %283 = vmatpush1.bf16.msra.mxu0 %v260
    %284 = vmatprep.subr.bf16.mxu0 0
    %285 = vmatpush1.bf16.msra.mxu0 %v261
    %286 = vmatprep.subr.bf16.mxu0 0
    %287 = vmatpush1.bf16.msra.mxu0 0
    %288 = vmatprep.subr.bf16.mxu0 0
    %289 = vmatpush1.bf16.msra.mxu0 0
    %290 = vmatprep.subr.bf16.mxu0 0
    %291 = vmatpush1.bf16.msra.mxu0 0
    %292 = vmatprep.subr.bf16.mxu0 0
    %293 = vmatpush1.bf16.msra.mxu0 0
    %294 = vmatprep.subr.bf16.mxu0 0
    %295 = vmatpush1.bf16.msra.mxu0 0
    %296 = vmatprep.subr.bf16.mxu0 0
    %297 = vmatpush1.bf16.msra.mxu0 0
    %298 = vmatprep.subr.bf16.mxu0 0
    %299 = vmatpush1.bf16.msra.mxu0 0
    %300 = vmatprep.subr.bf16.mxu0 0
    %301 = vmatpush1.bf16.msra.mxu0 0
    %302 = vmatprep.mubr.bf16.mxu0 0
    %303 = vmatmul.mubr.bf16.gmra.mrb[0].mxu0 %v198
    %v304 = vpop.f32.mrb[0].mxu0
    %v305 = vadd.f32 %v220, %v304
    %v306 = vpop.f32.mrb[0].mxu0
    %v307 = vpop.f32.mrb[0].mxu0
    %v308 = vadd.f32 %v220, %v307
    %v309 = vpop.f32.mrb[0].mxu0
    %310 = vdwg.mxu0
    %v311 = vmax.f32 %v305, 0.0
    %v312 = vmax.f32 %v308, 0.0
    %v313 = vpack.c.bf16 %v312, %v311
    %v314 = vld [vmem:[#allocation8] sm:$0xf]
    %v315 = vld [vmem:[#allocation8 + $0x4] sm:$0xf]
    %v316 = vld [vmem:[#allocation8 + $0x8] sm:$0xf]
    %v317 = vld [vmem:[#allocation8 + $0xc] sm:$0xf]
    %v318 = vld [vmem:[#allocation8 + $0x10] sm:$0xf]
    %v319 = vld [vmem:[#allocation8 + $0x14] sm:$0xf]
    %v320 = vld [vmem:[#allocation8 + $0x18] sm:$0xf]
    %v321 = vld [vmem:[#allocation8 + $0x1c] sm:$0xf]
    %v322 = vld [vmem:[#allocation8 + $0x20] sm:$0xf]
    %v323 = vld [vmem:[#allocation8 + $0x24] sm:$0xf]
    %v324 = vld [vmem:[#allocation8 + $0x28] sm:$0xf]
    %v325 = vld [vmem:[#allocation8 + $0x2c] sm:$0xf]
    %v326 = vld [vmem:[#allocation8 + $0x30] sm:$0xf]
    %v327 = vld [vmem:[#allocation8 + $0x34] sm:$0xf]
    %v328 = vld [vmem:[#allocation8 + $0x38] sm:$0xf]
    %v329 = vld [vmem:[#allocation8 + $0x3c] sm:$0xf]
    %v330 = vld [vmem:[%s6] sm:$0x1]
    %v332 = vlaneseq
    %v333 = vshrl.u32 %v332, 7
    %v334 = vsub.s32 0, %v333
    %v335 = vrot.slane %v330, %v334
    %v353 = vunpack.c.l.b16 %v314
    %v354 = vunpack.c.l.b16 %v315
    %v355 = vunpack.c.l.b16 %v316
    %v356 = vunpack.c.l.b16 %v317
    %v357 = vunpack.c.l.b16 %v318
    %v358 = vunpack.c.l.b16 %v319
    %v359 = vunpack.c.l.b16 %v320
    %v360 = vunpack.c.l.b16 %v321
    %v361 = vunpack.c.l.b16 %v322
    %v362 = vunpack.c.l.b16 %v323
    %v363 = vunpack.c.l.b16 %v324
    %v364 = vunpack.c.l.b16 %v325
    %v365 = vunpack.c.l.b16 %v326
    %v366 = vunpack.c.l.b16 %v327
    %v367 = vunpack.c.l.b16 %v328
    %v368 = vunpack.c.l.b16 %v329
    %v369 = vpack.c.b16 %v354, %v353
    %v370 = vpack.c.b16 %v356, %v355
    %v371 = vpack.c.b16 %v358, %v357
    %v372 = vpack.c.b16 %v360, %v359
    %v373 = vpack.c.b16 %v362, %v361
    %v374 = vpack.c.b16 %v364, %v363
    %v375 = vpack.c.b16 %v366, %v365
    %v376 = vpack.c.b16 %v368, %v367
    %385 = vmatprep.subr.bf16.mxu0 0
    %386 = vmatpush1.bf16.msra.mxu0 %v369
    %387 = vmatprep.subr.bf16.mxu0 0
    %388 = vmatpush1.bf16.msra.mxu0 %v370
    %389 = vmatprep.subr.bf16.mxu0 0
    %390 = vmatpush1.bf16.msra.mxu0 %v371
    %391 = vmatprep.subr.bf16.mxu0 0
    %392 = vmatpush1.bf16.msra.mxu0 %v372
    %393 = vmatprep.subr.bf16.mxu0 0
    %394 = vmatpush1.bf16.msra.mxu0 %v373
    %395 = vmatprep.subr.bf16.mxu0 0
    %396 = vmatpush1.bf16.msra.mxu0 %v374
    %397 = vmatprep.subr.bf16.mxu0 0
    %398 = vmatpush1.bf16.msra.mxu0 %v375
    %399 = vmatprep.subr.bf16.mxu0 0
    %400 = vmatpush1.bf16.msra.mxu0 %v376
    %401 = vmatprep.subr.bf16.mxu0 0
    %402 = vmatpush1.bf16.msra.mxu0 0
    %403 = vmatprep.subr.bf16.mxu0 0
    %404 = vmatpush1.bf16.msra.mxu0 0
    %405 = vmatprep.subr.bf16.mxu0 0
    %406 = vmatpush1.bf16.msra.mxu0 0
    %407 = vmatprep.subr.bf16.mxu0 0
    %408 = vmatpush1.bf16.msra.mxu0 0
    %409 = vmatprep.subr.bf16.mxu0 0
    %410 = vmatpush1.bf16.msra.mxu0 0
    %411 = vmatprep.subr.bf16.mxu0 0
    %412 = vmatpush1.bf16.msra.mxu0 0
    %413 = vmatprep.subr.bf16.mxu0 0
    %414 = vmatpush1.bf16.msra.mxu0 0
    %415 = vmatprep.subr.bf16.mxu0 0
    %416 = vmatpush1.bf16.msra.mxu0 0
    %417 = vmatprep.mubr.bf16.mxu0 0
    %418 = vmatmul.mubr.bf16.gmra.mrb[0].mxu0 %v313
    %v419 = vpop.f32.mrb[0].mxu0
    %v420 = vadd.f32 %v335, %v419
    %v421 = vpop.f32.mrb[0].mxu0
    %v422 = vpop.f32.mrb[0].mxu0
    %v423 = vadd.f32 %v335, %v422
    %v424 = vpop.f32.mrb[0].mxu0
    %425 = vdwg.mxu0
    %426 = vst [vmem:[#allocation10] sm:$0xff] %v420
    %427 = vst [vmem:[#allocation10 + $0x8] sm:$0xff] %v423
    // Predicated region
    $region46: #{tpu_custom_call.1} parent=1 // pred_check
      _
    $region47: #{tpu_custom_call.1} parent=1 // pred_check_branch
      %429 = sbr.rel (0) target = $region49
    $region48: #{tpu_custom_call.1} parent=1 // pred_region
      %s431 = ssub.s32 256, 256
      %432 = vsyncadd [#allocation4], %s431
      %s433 = sshll.u32 [#allocation10], 4
      %s434 = int_to_ptr.vmem [resolvable:$true] %s433
      %439 = dma.vmem_to_hbm [thread:$0]  %s434, 256, %s7, [#allocation4], 128, 128, 8
    $region49: #{tpu_custom_call.1} parent=1 // pred_fallthru
      _
    // Predicated region
    $region50: #{tpu_custom_call.1} parent=1 // pred_check
      _
    $region51: #{tpu_custom_call.1} parent=1 // pred_check_branch
      %441 = sbr.rel (0) target = $region53
    $region52: #{tpu_custom_call.1} parent=1 // pred_region
      %442 = dma.done [#allocation4], 256
    $region53: #{tpu_custom_call.1} parent=1 // pred_fallthru
      _
    %443 = vsyncpa [#allocation3], 1
    %444 = vsyncpa [#allocation6], 1
    %445 = vsyncpa [#allocation9], 1
    %446 = vsyncpa [#allocation4], 1

</llo_original>
